<compile_context>
chip_gen: v5e
topology: v5e:2x2
jax: 0.10.0
libtpu: 0.0.40
codegen_flags: <defaults>
</compile_context>

<pallas_src>
import functools

import numpy as np
import jax
import jax.numpy as jnp
from jax import lax
from jax.experimental import pallas as pl
from jax.experimental.pallas import tpu as pltpu


def _round_up(x, m):
    return (x + m - 1) // m * m


# --------------------------------------------------------------------------------------
# Pallas kernel
# --------------------------------------------------------------------------------------
def _make_kernel(region_relation: str, n_kernels: int, N: int, F: int):
    """Kernel factory; all arguments are static (trace-time)."""
    K = n_kernels
    NK = N * K
    two_pi = 2.0 * np.pi

    def kernel(coords_ref, nb_ref, prm_ref, wbd_ref, out_ref):
        # coords_ref : (T, n_coord*NK)  coordinates replicated over kernels (n-major, k-minor)
        # nb_ref     : (T, N*F)         flattened neighbourhood features
        # prm_ref    : (2*n_coord, NK)  [mean_a; prec_a; (mean_b; prec_b)] tiled over n
        # wbd_ref    : (K*F, out_feat)  block-diagonal stacked per-kernel weights (W_i^T)
        # out_ref    : (T, out_feat)
        prm = prm_ref[...]
        mean_a = prm[0:1, :]                                       # (1, NK)
        prec_a = prm[1:2, :]

        ca = coords_ref[:, 0:NK]                                   # (T, NK)
        diff = ca - mean_a
        w = jnp.exp(-0.5 * diff * diff / (1e-14 + prec_a * prec_a))

        if region_relation == "Position_relation":
            mean_b = prm[2:3, :]
            prec_b = prm[3:4, :]
            cb = coords_ref[:, NK:2 * NK]                          # theta
            first_angle = jnp.abs(cb - mean_b)
            second_angle = jnp.abs(two_pi - first_angle)
            ang = jnp.minimum(first_angle, second_angle)
            w = w * jnp.exp(-0.5 * ang * ang / (1e-14 + prec_b * prec_b))
            # weights[weights != weights] = 0
            w = jnp.where(jnp.isnan(w), jnp.zeros_like(w), w)

        # ---- stage 1 (VPU): per-neighbour normalization + weighted sum over N --------
        # xs[k] accumulates weighted_neighbourhood[:, k, :]  of shape (T, F)
        xs = [None] * K
        for n in range(N):
            wn = w[:, n * K:(n + 1) * K]                           # (T, K)
            # normalization over the kernel axis (torch.sum(weights, dim=1))
            sn = jnp.sum(wn, axis=-1, keepdims=True)               # (T, 1)
            # exact divide kept for numerical parity with the reference;
            # pl.reciprocal(sn, approx=True) is a further EUP-offload option.
            wn = wn / sn
            nbn = nb_ref[:, n * F:(n + 1) * F]                     # (T, F)
            for k in range(K):
                contrib = wn[:, k:k + 1] * nbn
                xs[k] = contrib if xs[k] is None else xs[k] + contrib

        # ---- stage 2 (MXU): block-diagonal per-kernel linear projection --------------
        acc = jnp.dot(xs[0], wbd_ref[0:F, :], preferred_element_type=jnp.float32)
        for k in range(1, K):
            acc = acc + jnp.dot(xs[k], wbd_ref[k * F:(k + 1) * F, :],
                                preferred_element_type=jnp.float32)
        out_ref[...] = acc.astype(out_ref.dtype)

    return kernel


# --------------------------------------------------------------------------------------
# Wrapper (layout plumbing in plain JAX)
# --------------------------------------------------------------------------------------
@functools.partial(jax.jit, static_argnames=("region_relation", "tile_bk"))
def t2i_graph_convolution(neighbourhood_features, region_relation_weights, params,
                          region_relation="Position_relation", tile_bk=512):
    B, K_regions, N, F = neighbourhood_features.shape
    BK = B * K_regions
    w_stack = params["w_stack"]                  # (n_kernels, F, out_k) == stacked W_i^T
    n_kernels, _, out_k = w_stack.shape
    out_feat = n_kernels * out_k
    NK = N * n_kernels

    # lane-dense 2-D slab of features (free reshape of contiguous trailing dims)
    nb_flat = neighbourhood_features.reshape(BK, N * F).astype(jnp.float32)

    if region_relation == "Position_relation":
        ca = region_relation_weights[..., 0].reshape(BK, N).astype(jnp.float32)
        cb = region_relation_weights[..., 1].reshape(BK, N).astype(jnp.float32)
        # replicate each coordinate over the kernel axis (n-major, k-minor) and fuse
        coords = jnp.concatenate(
            [jnp.repeat(ca, n_kernels, axis=-1), jnp.repeat(cb, n_kernels, axis=-1)],
            axis=-1)                                               # (BK, 2*NK)
        prm = jnp.stack([
            jnp.tile(params["mean_rho"].reshape(-1), N),
            jnp.tile(params["precision_rho"].reshape(-1), N),
            jnp.tile(params["mean_theta"].reshape(-1), N),
            jnp.tile(params["precision_theta"].reshape(-1), N),
        ], axis=0).astype(jnp.float32)                             # (4, NK)
        n_coord = 2
    else:  # 'NTN_relation'
        cn = region_relation_weights[..., 2].reshape(BK, N).astype(jnp.float32)
        coords = jnp.repeat(cn, n_kernels, axis=-1)                # (BK, NK)
        prm = jnp.stack([
            jnp.tile(params["mean_NTN_relation"].reshape(-1), N),
            jnp.tile(params["precision_NTN_relation"].reshape(-1), N),
        ], axis=0).astype(jnp.float32)                             # (2, NK)
        n_coord = 1

    # block-diagonal stacked per-kernel weights: rows k*F:(k+1)*F carry W_k^T in
    # columns k*out_k:(k+1)*out_k
    wbd = jnp.zeros((n_kernels * F, out_feat), jnp.float32)
    for k in range(n_kernels):
        wbd = wbd.at[k * F:(k + 1) * F, k * out_k:(k + 1) * out_k].set(
            w_stack[k].astype(jnp.float32))

    # BK tile: as large as reasonable (default 512 rows), multiple of 8 sublanes;
    # pad BK up to a tile multiple (padded rows are sliced off after the call).
    tile = max(8, min(int(tile_bk), _round_up(BK, 8)))
    tile = _round_up(tile, 8)
    bk_pad = _round_up(BK, tile)
    if bk_pad != BK:
        nb_flat = jnp.pad(nb_flat, ((0, bk_pad - BK), (0, 0)))
        coords = jnp.pad(coords, ((0, bk_pad - BK), (0, 0)))

    out = pl.pallas_call(
        _make_kernel(region_relation, n_kernels, N, F),
        grid=(bk_pad // tile,),
        in_specs=[
            pl.BlockSpec((tile, n_coord * NK), lambda i: (i, 0)),       # coordinates
            pl.BlockSpec((tile, N * F), lambda i: (i, 0)),              # neighbourhood
            pl.BlockSpec((2 * n_coord, NK), lambda i: (0, 0)),          # gaussian params
            pl.BlockSpec((n_kernels * F, out_feat), lambda i: (0, 0)),  # block-diag weights
        ],
        out_specs=pl.BlockSpec((tile, out_feat), lambda i: (i, 0)),
        out_shape=jax.ShapeDtypeStruct((bk_pad, out_feat), jnp.float32),
        compiler_params=pltpu.CompilerParams(dimension_semantics=("parallel",)),
    )(coords, nb_flat, prm, wbd)

    # rows are (b-major, K-minor) and columns are [kernel0 | kernel1 | ...] -> matches
    # torch.cat over kernels followed by .view(-1, K, out_feat)
    return out[:BK].reshape(B, K_regions, out_feat)


# --------------------------------------------------------------------------------------
# Pure-JAX reference (mirrors the PyTorch forward exactly) for verification
# --------------------------------------------------------------------------------------
def reference_forward(neighbourhood_features, region_relation_weights, params,
                      region_relation="Position_relation"):
    B, K, N, F = neighbourhood_features.shape
    n_kernels = params["w_stack"].shape[0]
    hp = lax.Precision.HIGHEST
    if region_relation == "Position_relation":
        rho = region_relation_weights[..., 0].reshape(-1, 1)
        theta = region_relation_weights[..., 1].reshape(-1, 1)
        mr = params["mean_rho"].reshape(1, -1)
        pr = params["precision_rho"].reshape(1, -1)
        mt = params["mean_theta"].reshape(1, -1)
        pt = params["precision_theta"].reshape(1, -1)
        w_rho = jnp.exp(-0.5 * (rho - mr) ** 2 / (1e-14 + pr ** 2))
        first = jnp.abs(theta - mt)
        second = jnp.abs(2 * np.pi - first)
        w_theta = jnp.exp(-0.5 * jnp.minimum(first, second) ** 2 / (1e-14 + pt ** 2))
        w = w_rho * w_theta
        w = jnp.where(jnp.isnan(w), 0.0, w)
    else:
        ntn = region_relation_weights[..., 2].reshape(-1, 1)
        mn = params["mean_NTN_relation"].reshape(1, -1)
        pn = params["precision_NTN_relation"].reshape(1, -1)
        w = jnp.exp(-0.5 * (ntn - mn) ** 2 / (1e-14 + pn ** 2))
    w = w / jnp.sum(w, axis=1, keepdims=True)
    w = w.reshape(B * K, N, n_kernels)
    nb = neighbourhood_features.reshape(B * K, N, F)
    weighted = jnp.einsum("bnk,bnf->bkf", w, nb, precision=hp)        # bmm(weights^T, nb)
    out = jnp.einsum("bkf,kfo->bko", weighted, params["w_stack"], precision=hp)
    return out.reshape(B, K, -1)


# --------------------------------------------------------------------------------------
# Main
# --------------------------------------------------------------------------------------
if __name__ == "__main__":
    # small shapes consistent with the module
    B, K, N = 2, 4, 8                 # batch, regions, neighbourhood size
    in_feat_dim, out_feat_dim = 32, 32
    n_kernels, coordinate_dim = 4, 3
    out_k = out_feat_dim // n_kernels

    key = jax.random.PRNGKey(0)
    keys = jax.random.split(key, 12)

    # deterministic parameter init (mirrors init_parameters + nn.Linear default init)
    bound = 1.0 / np.sqrt(in_feat_dim)
    w_torch_layout = jax.random.uniform(
        keys[0], (n_kernels, out_k, in_feat_dim), jnp.float32, -bound, bound
    )
    params = {
        "mean_theta": jax.random.uniform(keys[1], (n_kernels, 1), jnp.float32, -np.pi, np.pi),
        "mean_rho": jax.random.uniform(keys[2], (n_kernels, 1), jnp.float32, 0.0, 1.0),
        "precision_theta": jax.random.uniform(keys[3], (n_kernels, 1), jnp.float32, 0.0, 1.0),
        "precision_rho": jax.random.uniform(keys[4], (n_kernels, 1), jnp.float32, 0.0, 1.0),
        "mean_NTN_relation": jax.random.uniform(keys[5], (n_kernels, 1), jnp.float32, 0.0, 1.0),
        "precision_NTN_relation": jax.random.uniform(keys[6], (n_kernels, 1), jnp.float32, 0.0, 1.0),
        # stacked W_i^T : (n_kernels, in_feat, out_k)
        "w_stack": jnp.transpose(w_torch_layout, (0, 2, 1)),
    }

    # deterministic example inputs
    neighbourhood_features = jax.random.normal(keys[7], (B, K, N, in_feat_dim), jnp.float32)
    rho = jax.random.uniform(keys[8], (B, K, N, 1), jnp.float32, 0.0, 1.0)
    theta = jax.random.uniform(keys[9], (B, K, N, 1), jnp.float32, -np.pi, np.pi)
    ntn = jax.random.uniform(keys[10], (B, K, N, 1), jnp.float32, 0.0, 1.0)
    region_relation_weights = jnp.concatenate([rho, theta, ntn], axis=-1)  # (B,K,N,3)

    for rel in ("Position_relation", "NTN_relation"):
        out = t2i_graph_convolution(
            neighbourhood_features, region_relation_weights, params, region_relation=rel
        )
        out = jax.block_until_ready(out)
        ref = reference_forward(
            neighbourhood_features, region_relation_weights, params, region_relation=rel
        )
        # tolerance leaves headroom for possible reduced-precision f32 MXU contraction
        # of the final projection inside the kernel; real bugs produce O(1) errors.
        np.testing.assert_allclose(np.asarray(out), np.asarray(ref), rtol=1e-2, atol=1e-2)
        assert out.shape == (B, K, out_feat_dim)

    print("KERNEL_OK")
</pallas_src>

<mosaic_0001>
module attributes {stable_mosaic.version = 11 : i64} {
  func.func @kernel(%arg0: i32, %arg1: memref<8x64xf32, #tpu.memory_space<vmem>>, %arg2: memref<8x256xf32, #tpu.memory_space<vmem>>, %arg3: memref<4x32xf32, #tpu.memory_space<vmem>>, %arg4: memref<128x32xf32, #tpu.memory_space<vmem>>, %arg5: memref<8x32xf32, #tpu.memory_space<vmem>>) attributes {dimension_semantics = [#tpu.dimension_semantics<parallel>], iteration_bounds = array<i64: 1>, scalar_prefetch = 0 : i64, scratch_operands = 0 : i64, tpu.core_type = #tpu.core_type<tc>, window_params = [{transform_indices = @transform_0, window_bounds = array<i64: 8, 64>}, {transform_indices = @transform_1, window_bounds = array<i64: 8, 256>}, {pipeline_mode = #tpu.pipeline_mode<synchronous>, transform_indices = @transform_2, window_bounds = array<i64: 4, 32>}, {pipeline_mode = #tpu.pipeline_mode<synchronous>, transform_indices = @transform_3, window_bounds = array<i64: 128, 32>}, {transform_indices = @transform_4, window_bounds = array<i64: 8, 32>}]} {
    %c0 = arith.constant 0 : index
    %c0_0 = arith.constant 0 : index
    %0 = vector.load %arg3[%c0, %c0_0] : memref<4x32xf32, #tpu.memory_space<vmem>>, vector<4x32xf32>
    %1 = vector.extract_strided_slice %0 {offsets = [0, 0], sizes = [1, 32], strides = [1, 1]} : vector<4x32xf32> to vector<1x32xf32>
    %2 = vector.extract_strided_slice %0 {offsets = [1, 0], sizes = [1, 32], strides = [1, 1]} : vector<4x32xf32> to vector<1x32xf32>
    %c0_1 = arith.constant 0 : index
    %c0_2 = arith.constant 0 : index
    %3 = vector.load %arg1[%c0_1, %c0_2] : memref<8x64xf32, #tpu.memory_space<vmem>>, vector<8x32xf32>
    %4 = vector.broadcast %1 : vector<1x32xf32> to vector<8x32xf32>
    %5 = arith.subf %3, %4 : vector<8x32xf32>
    %cst = arith.constant -5.000000e-01 : f32
    %6 = vector.broadcast %cst : f32 to vector<8x32xf32>
    %7 = arith.mulf %6, %5 : vector<8x32xf32>
    %8 = arith.mulf %7, %5 : vector<8x32xf32>
    %9 = arith.mulf %2, %2 : vector<1x32xf32>
    %cst_3 = arith.constant 9.99999982E-15 : f32
    %10 = vector.broadcast %cst_3 : f32 to vector<1x32xf32>
    %11 = arith.addf %10, %9 : vector<1x32xf32>
    %12 = vector.broadcast %11 : vector<1x32xf32> to vector<8x32xf32>
    %13 = arith.divf %8, %12 : vector<8x32xf32>
    %14 = math.exp %13 : vector<8x32xf32>
    %15 = vector.extract_strided_slice %0 {offsets = [2, 0], sizes = [1, 32], strides = [1, 1]} : vector<4x32xf32> to vector<1x32xf32>
    %16 = vector.extract_strided_slice %0 {offsets = [3, 0], sizes = [1, 32], strides = [1, 1]} : vector<4x32xf32> to vector<1x32xf32>
    %c0_4 = arith.constant 0 : index
    %c32 = arith.constant 32 : index
    %17 = vector.load %arg1[%c0_4, %c32] : memref<8x64xf32, #tpu.memory_space<vmem>>, vector<8x32xf32>
    %18 = vector.broadcast %15 : vector<1x32xf32> to vector<8x32xf32>
    %19 = arith.subf %17, %18 : vector<8x32xf32>
    %20 = math.absf %19 : vector<8x32xf32>
    %cst_5 = arith.constant 6.28318548 : f32
    %21 = vector.broadcast %cst_5 : f32 to vector<8x32xf32>
    %22 = arith.subf %21, %20 : vector<8x32xf32>
    %23 = math.absf %22 : vector<8x32xf32>
    %24 = arith.minimumf %20, %23 : vector<8x32xf32>
    %cst_6 = arith.constant -5.000000e-01 : f32
    %25 = vector.broadcast %cst_6 : f32 to vector<8x32xf32>
    %26 = arith.mulf %25, %24 : vector<8x32xf32>
    %27 = arith.mulf %26, %24 : vector<8x32xf32>
    %28 = arith.mulf %16, %16 : vector<1x32xf32>
    %cst_7 = arith.constant 9.99999982E-15 : f32
    %29 = vector.broadcast %cst_7 : f32 to vector<1x32xf32>
    %30 = arith.addf %29, %28 : vector<1x32xf32>
    %31 = vector.broadcast %30 : vector<1x32xf32> to vector<8x32xf32>
    %32 = arith.divf %27, %31 : vector<8x32xf32>
    %33 = math.exp %32 : vector<8x32xf32>
    %34 = arith.mulf %14, %33 : vector<8x32xf32>
    %35 = arith.cmpf one, %34, %34 : vector<8x32xf32>
    %cst_8 = arith.constant 0.000000e+00 : f32
    %36 = vector.broadcast %cst_8 : f32 to vector<8x32xf32>
    %37 = arith.select %35, %36, %34 : vector<8x32xi1>, vector<8x32xf32>
    %38 = vector.extract_strided_slice %37 {offsets = [0, 0], sizes = [8, 4], strides = [1, 1]} : vector<8x32xf32> to vector<8x4xf32>
    %cst_9 = arith.constant dense<0.000000e+00> : vector<8xf32>
    %39 = vector.multi_reduction <add>, %38, %cst_9 [1] : vector<8x4xf32> to vector<8xf32>
    %40 = vector.shape_cast %39 : vector<8xf32> to vector<8x1xf32>
    %41 = vector.broadcast %40 : vector<8x1xf32> to vector<8x4xf32>
    %42 = arith.divf %38, %41 : vector<8x4xf32>
    %c0_10 = arith.constant 0 : index
    %c0_11 = arith.constant 0 : index
    %43 = vector.load %arg2[%c0_10, %c0_11] : memref<8x256xf32, #tpu.memory_space<vmem>>, vector<8x32xf32>
    %44 = vector.extract_strided_slice %42 {offsets = [0, 0], sizes = [8, 1], strides = [1, 1]} : vector<8x4xf32> to vector<8x1xf32>
    %45 = vector.broadcast %44 : vector<8x1xf32> to vector<8x32xf32>
    %46 = arith.mulf %45, %43 : vector<8x32xf32>
    %47 = vector.extract_strided_slice %42 {offsets = [0, 1], sizes = [8, 1], strides = [1, 1]} : vector<8x4xf32> to vector<8x1xf32>
    %48 = vector.broadcast %47 : vector<8x1xf32> to vector<8x32xf32>
    %49 = arith.mulf %48, %43 : vector<8x32xf32>
    %50 = vector.extract_strided_slice %42 {offsets = [0, 2], sizes = [8, 1], strides = [1, 1]} : vector<8x4xf32> to vector<8x1xf32>
    %51 = vector.broadcast %50 : vector<8x1xf32> to vector<8x32xf32>
    %52 = arith.mulf %51, %43 : vector<8x32xf32>
    %53 = vector.extract_strided_slice %42 {offsets = [0, 3], sizes = [8, 1], strides = [1, 1]} : vector<8x4xf32> to vector<8x1xf32>
    %54 = vector.broadcast %53 : vector<8x1xf32> to vector<8x32xf32>
    %55 = arith.mulf %54, %43 : vector<8x32xf32>
    %56 = vector.extract_strided_slice %37 {offsets = [0, 4], sizes = [8, 4], strides = [1, 1]} : vector<8x32xf32> to vector<8x4xf32>
    %cst_12 = arith.constant dense<0.000000e+00> : vector<8xf32>
    %57 = vector.multi_reduction <add>, %56, %cst_12 [1] : vector<8x4xf32> to vector<8xf32>
    %58 = vector.shape_cast %57 : vector<8xf32> to vector<8x1xf32>
    %59 = vector.broadcast %58 : vector<8x1xf32> to vector<8x4xf32>
    %60 = arith.divf %56, %59 : vector<8x4xf32>
    %c0_13 = arith.constant 0 : index
    %c32_14 = arith.constant 32 : index
    %61 = vector.load %arg2[%c0_13, %c32_14] : memref<8x256xf32, #tpu.memory_space<vmem>>, vector<8x32xf32>
    %62 = vector.extract_strided_slice %60 {offsets = [0, 0], sizes = [8, 1], strides = [1, 1]} : vector<8x4xf32> to vector<8x1xf32>
    %63 = vector.broadcast %62 : vector<8x1xf32> to vector<8x32xf32>
    %64 = arith.mulf %63, %61 : vector<8x32xf32>
    %65 = arith.addf %46, %64 : vector<8x32xf32>
    %66 = vector.extract_strided_slice %60 {offsets = [0, 1], sizes = [8, 1], strides = [1, 1]} : vector<8x4xf32> to vector<8x1xf32>
    %67 = vector.broadcast %66 : vector<8x1xf32> to vector<8x32xf32>
    %68 = arith.mulf %67, %61 : vector<8x32xf32>
    %69 = arith.addf %49, %68 : vector<8x32xf32>
    %70 = vector.extract_strided_slice %60 {offsets = [0, 2], sizes = [8, 1], strides = [1, 1]} : vector<8x4xf32> to vector<8x1xf32>
    %71 = vector.broadcast %70 : vector<8x1xf32> to vector<8x32xf32>
    %72 = arith.mulf %71, %61 : vector<8x32xf32>
    %73 = arith.addf %52, %72 : vector<8x32xf32>
    %74 = vector.extract_strided_slice %60 {offsets = [0, 3], sizes = [8, 1], strides = [1, 1]} : vector<8x4xf32> to vector<8x1xf32>
    %75 = vector.broadcast %74 : vector<8x1xf32> to vector<8x32xf32>
    %76 = arith.mulf %75, %61 : vector<8x32xf32>
    %77 = arith.addf %55, %76 : vector<8x32xf32>
    %78 = vector.extract_strided_slice %37 {offsets = [0, 8], sizes = [8, 4], strides = [1, 1]} : vector<8x32xf32> to vector<8x4xf32>
    %cst_15 = arith.constant dense<0.000000e+00> : vector<8xf32>
    %79 = vector.multi_reduction <add>, %78, %cst_15 [1] : vector<8x4xf32> to vector<8xf32>
    %80 = vector.shape_cast %79 : vector<8xf32> to vector<8x1xf32>
    %81 = vector.broadcast %80 : vector<8x1xf32> to vector<8x4xf32>
    %82 = arith.divf %78, %81 : vector<8x4xf32>
    %c0_16 = arith.constant 0 : index
    %c64 = arith.constant 64 : index
    %83 = vector.load %arg2[%c0_16, %c64] : memref<8x256xf32, #tpu.memory_space<vmem>>, vector<8x32xf32>
    %84 = vector.extract_strided_slice %82 {offsets = [0, 0], sizes = [8, 1], strides = [1, 1]} : vector<8x4xf32> to vector<8x1xf32>
    %85 = vector.broadcast %84 : vector<8x1xf32> to vector<8x32xf32>
    %86 = arith.mulf %85, %83 : vector<8x32xf32>
    %87 = arith.addf %65, %86 : vector<8x32xf32>
    %88 = vector.extract_strided_slice %82 {offsets = [0, 1], sizes = [8, 1], strides = [1, 1]} : vector<8x4xf32> to vector<8x1xf32>
    %89 = vector.broadcast %88 : vector<8x1xf32> to vector<8x32xf32>
    %90 = arith.mulf %89, %83 : vector<8x32xf32>
    %91 = arith.addf %69, %90 : vector<8x32xf32>
    %92 = vector.extract_strided_slice %82 {offsets = [0, 2], sizes = [8, 1], strides = [1, 1]} : vector<8x4xf32> to vector<8x1xf32>
    %93 = vector.broadcast %92 : vector<8x1xf32> to vector<8x32xf32>
    %94 = arith.mulf %93, %83 : vector<8x32xf32>
    %95 = arith.addf %73, %94 : vector<8x32xf32>
    %96 = vector.extract_strided_slice %82 {offsets = [0, 3], sizes = [8, 1], strides = [1, 1]} : vector<8x4xf32> to vector<8x1xf32>
    %97 = vector.broadcast %96 : vector<8x1xf32> to vector<8x32xf32>
    %98 = arith.mulf %97, %83 : vector<8x32xf32>
    %99 = arith.addf %77, %98 : vector<8x32xf32>
    %100 = vector.extract_strided_slice %37 {offsets = [0, 12], sizes = [8, 4], strides = [1, 1]} : vector<8x32xf32> to vector<8x4xf32>
    %cst_17 = arith.constant dense<0.000000e+00> : vector<8xf32>
    %101 = vector.multi_reduction <add>, %100, %cst_17 [1] : vector<8x4xf32> to vector<8xf32>
    %102 = vector.shape_cast %101 : vector<8xf32> to vector<8x1xf32>
    %103 = vector.broadcast %102 : vector<8x1xf32> to vector<8x4xf32>
    %104 = arith.divf %100, %103 : vector<8x4xf32>
    %c0_18 = arith.constant 0 : index
    %c96 = arith.constant 96 : index
    %105 = vector.load %arg2[%c0_18, %c96] : memref<8x256xf32, #tpu.memory_space<vmem>>, vector<8x32xf32>
    %106 = vector.extract_strided_slice %104 {offsets = [0, 0], sizes = [8, 1], strides = [1, 1]} : vector<8x4xf32> to vector<8x1xf32>
    %107 = vector.broadcast %106 : vector<8x1xf32> to vector<8x32xf32>
    %108 = arith.mulf %107, %105 : vector<8x32xf32>
    %109 = arith.addf %87, %108 : vector<8x32xf32>
    %110 = vector.extract_strided_slice %104 {offsets = [0, 1], sizes = [8, 1], strides = [1, 1]} : vector<8x4xf32> to vector<8x1xf32>
    %111 = vector.broadcast %110 : vector<8x1xf32> to vector<8x32xf32>
    %112 = arith.mulf %111, %105 : vector<8x32xf32>
    %113 = arith.addf %91, %112 : vector<8x32xf32>
    %114 = vector.extract_strided_slice %104 {offsets = [0, 2], sizes = [8, 1], strides = [1, 1]} : vector<8x4xf32> to vector<8x1xf32>
    %115 = vector.broadcast %114 : vector<8x1xf32> to vector<8x32xf32>
    %116 = arith.mulf %115, %105 : vector<8x32xf32>
    %117 = arith.addf %95, %116 : vector<8x32xf32>
    %118 = vector.extract_strided_slice %104 {offsets = [0, 3], sizes = [8, 1], strides = [1, 1]} : vector<8x4xf32> to vector<8x1xf32>
    %119 = vector.broadcast %118 : vector<8x1xf32> to vector<8x32xf32>
    %120 = arith.mulf %119, %105 : vector<8x32xf32>
    %121 = arith.addf %99, %120 : vector<8x32xf32>
    %122 = vector.extract_strided_slice %37 {offsets = [0, 16], sizes = [8, 4], strides = [1, 1]} : vector<8x32xf32> to vector<8x4xf32>
    %cst_19 = arith.constant dense<0.000000e+00> : vector<8xf32>
    %123 = vector.multi_reduction <add>, %122, %cst_19 [1] : vector<8x4xf32> to vector<8xf32>
    %124 = vector.shape_cast %123 : vector<8xf32> to vector<8x1xf32>
    %125 = vector.broadcast %124 : vector<8x1xf32> to vector<8x4xf32>
    %126 = arith.divf %122, %125 : vector<8x4xf32>
    %c0_20 = arith.constant 0 : index
    %c128 = arith.constant 128 : index
    %127 = vector.load %arg2[%c0_20, %c128] : memref<8x256xf32, #tpu.memory_space<vmem>>, vector<8x32xf32>
    %128 = vector.extract_strided_slice %126 {offsets = [0, 0], sizes = [8, 1], strides = [1, 1]} : vector<8x4xf32> to vector<8x1xf32>
    %129 = vector.broadcast %128 : vector<8x1xf32> to vector<8x32xf32>
    %130 = arith.mulf %129, %127 : vector<8x32xf32>
    %131 = arith.addf %109, %130 : vector<8x32xf32>
    %132 = vector.extract_strided_slice %126 {offsets = [0, 1], sizes = [8, 1], strides = [1, 1]} : vector<8x4xf32> to vector<8x1xf32>
    %133 = vector.broadcast %132 : vector<8x1xf32> to vector<8x32xf32>
    %134 = arith.mulf %133, %127 : vector<8x32xf32>
    %135 = arith.addf %113, %134 : vector<8x32xf32>
    %136 = vector.extract_strided_slice %126 {offsets = [0, 2], sizes = [8, 1], strides = [1, 1]} : vector<8x4xf32> to vector<8x1xf32>
    %137 = vector.broadcast %136 : vector<8x1xf32> to vector<8x32xf32>
    %138 = arith.mulf %137, %127 : vector<8x32xf32>
    %139 = arith.addf %117, %138 : vector<8x32xf32>
    %140 = vector.extract_strided_slice %126 {offsets = [0, 3], sizes = [8, 1], strides = [1, 1]} : vector<8x4xf32> to vector<8x1xf32>
    %141 = vector.broadcast %140 : vector<8x1xf32> to vector<8x32xf32>
    %142 = arith.mulf %141, %127 : vector<8x32xf32>
    %143 = arith.addf %121, %142 : vector<8x32xf32>
    %144 = vector.extract_strided_slice %37 {offsets = [0, 20], sizes = [8, 4], strides = [1, 1]} : vector<8x32xf32> to vector<8x4xf32>
    %cst_21 = arith.constant dense<0.000000e+00> : vector<8xf32>
    %145 = vector.multi_reduction <add>, %144, %cst_21 [1] : vector<8x4xf32> to vector<8xf32>
    %146 = vector.shape_cast %145 : vector<8xf32> to vector<8x1xf32>
    %147 = vector.broadcast %146 : vector<8x1xf32> to vector<8x4xf32>
    %148 = arith.divf %144, %147 : vector<8x4xf32>
    %c0_22 = arith.constant 0 : index
    %c160 = arith.constant 160 : index
    %149 = vector.load %arg2[%c0_22, %c160] : memref<8x256xf32, #tpu.memory_space<vmem>>, vector<8x32xf32>
    %150 = vector.extract_strided_slice %148 {offsets = [0, 0], sizes = [8, 1], strides = [1, 1]} : vector<8x4xf32> to vector<8x1xf32>
    %151 = vector.broadcast %150 : vector<8x1xf32> to vector<8x32xf32>
    %152 = arith.mulf %151, %149 : vector<8x32xf32>
    %153 = arith.addf %131, %152 : vector<8x32xf32>
    %154 = vector.extract_strided_slice %148 {offsets = [0, 1], sizes = [8, 1], strides = [1, 1]} : vector<8x4xf32> to vector<8x1xf32>
    %155 = vector.broadcast %154 : vector<8x1xf32> to vector<8x32xf32>
    %156 = arith.mulf %155, %149 : vector<8x32xf32>
    %157 = arith.addf %135, %156 : vector<8x32xf32>
    %158 = vector.extract_strided_slice %148 {offsets = [0, 2], sizes = [8, 1], strides = [1, 1]} : vector<8x4xf32> to vector<8x1xf32>
    %159 = vector.broadcast %158 : vector<8x1xf32> to vector<8x32xf32>
    %160 = arith.mulf %159, %149 : vector<8x32xf32>
    %161 = arith.addf %139, %160 : vector<8x32xf32>
    %162 = vector.extract_strided_slice %148 {offsets = [0, 3], sizes = [8, 1], strides = [1, 1]} : vector<8x4xf32> to vector<8x1xf32>
    %163 = vector.broadcast %162 : vector<8x1xf32> to vector<8x32xf32>
    %164 = arith.mulf %163, %149 : vector<8x32xf32>
    %165 = arith.addf %143, %164 : vector<8x32xf32>
    %166 = vector.extract_strided_slice %37 {offsets = [0, 24], sizes = [8, 4], strides = [1, 1]} : vector<8x32xf32> to vector<8x4xf32>
    %cst_23 = arith.constant dense<0.000000e+00> : vector<8xf32>
    %167 = vector.multi_reduction <add>, %166, %cst_23 [1] : vector<8x4xf32> to vector<8xf32>
    %168 = vector.shape_cast %167 : vector<8xf32> to vector<8x1xf32>
    %169 = vector.broadcast %168 : vector<8x1xf32> to vector<8x4xf32>
    %170 = arith.divf %166, %169 : vector<8x4xf32>
    %c0_24 = arith.constant 0 : index
    %c192 = arith.constant 192 : index
    %171 = vector.load %arg2[%c0_24, %c192] : memref<8x256xf32, #tpu.memory_space<vmem>>, vector<8x32xf32>
    %172 = vector.extract_strided_slice %170 {offsets = [0, 0], sizes = [8, 1], strides = [1, 1]} : vector<8x4xf32> to vector<8x1xf32>
    %173 = vector.broadcast %172 : vector<8x1xf32> to vector<8x32xf32>
    %174 = arith.mulf %173, %171 : vector<8x32xf32>
    %175 = arith.addf %153, %174 : vector<8x32xf32>
    %176 = vector.extract_strided_slice %170 {offsets = [0, 1], sizes = [8, 1], strides = [1, 1]} : vector<8x4xf32> to vector<8x1xf32>
    %177 = vector.broadcast %176 : vector<8x1xf32> to vector<8x32xf32>
    %178 = arith.mulf %177, %171 : vector<8x32xf32>
    %179 = arith.addf %157, %178 : vector<8x32xf32>
    %180 = vector.extract_strided_slice %170 {offsets = [0, 2], sizes = [8, 1], strides = [1, 1]} : vector<8x4xf32> to vector<8x1xf32>
    %181 = vector.broadcast %180 : vector<8x1xf32> to vector<8x32xf32>
    %182 = arith.mulf %181, %171 : vector<8x32xf32>
    %183 = arith.addf %161, %182 : vector<8x32xf32>
    %184 = vector.extract_strided_slice %170 {offsets = [0, 3], sizes = [8, 1], strides = [1, 1]} : vector<8x4xf32> to vector<8x1xf32>
    %185 = vector.broadcast %184 : vector<8x1xf32> to vector<8x32xf32>
    %186 = arith.mulf %185, %171 : vector<8x32xf32>
    %187 = arith.addf %165, %186 : vector<8x32xf32>
    %188 = vector.extract_strided_slice %37 {offsets = [0, 28], sizes = [8, 4], strides = [1, 1]} : vector<8x32xf32> to vector<8x4xf32>
    %cst_25 = arith.constant dense<0.000000e+00> : vector<8xf32>
    %189 = vector.multi_reduction <add>, %188, %cst_25 [1] : vector<8x4xf32> to vector<8xf32>
    %190 = vector.shape_cast %189 : vector<8xf32> to vector<8x1xf32>
    %191 = vector.broadcast %190 : vector<8x1xf32> to vector<8x4xf32>
    %192 = arith.divf %188, %191 : vector<8x4xf32>
    %c0_26 = arith.constant 0 : index
    %c224 = arith.constant 224 : index
    %193 = vector.load %arg2[%c0_26, %c224] : memref<8x256xf32, #tpu.memory_space<vmem>>, vector<8x32xf32>
    %194 = vector.extract_strided_slice %192 {offsets = [0, 0], sizes = [8, 1], strides = [1, 1]} : vector<8x4xf32> to vector<8x1xf32>
    %195 = vector.broadcast %194 : vector<8x1xf32> to vector<8x32xf32>
    %196 = arith.mulf %195, %193 : vector<8x32xf32>
    %197 = arith.addf %175, %196 : vector<8x32xf32>
    %198 = vector.extract_strided_slice %192 {offsets = [0, 1], sizes = [8, 1], strides = [1, 1]} : vector<8x4xf32> to vector<8x1xf32>
    %199 = vector.broadcast %198 : vector<8x1xf32> to vector<8x32xf32>
    %200 = arith.mulf %199, %193 : vector<8x32xf32>
    %201 = arith.addf %179, %200 : vector<8x32xf32>
    %202 = vector.extract_strided_slice %192 {offsets = [0, 2], sizes = [8, 1], strides = [1, 1]} : vector<8x4xf32> to vector<8x1xf32>
    %203 = vector.broadcast %202 : vector<8x1xf32> to vector<8x32xf32>
    %204 = arith.mulf %203, %193 : vector<8x32xf32>
    %205 = arith.addf %183, %204 : vector<8x32xf32>
    %206 = vector.extract_strided_slice %192 {offsets = [0, 3], sizes = [8, 1], strides = [1, 1]} : vector<8x4xf32> to vector<8x1xf32>
    %207 = vector.broadcast %206 : vector<8x1xf32> to vector<8x32xf32>
    %208 = arith.mulf %207, %193 : vector<8x32xf32>
    %209 = arith.addf %187, %208 : vector<8x32xf32>
    %c0_27 = arith.constant 0 : index
    %c0_28 = arith.constant 0 : index
    %210 = vector.load %arg4[%c0_27, %c0_28] : memref<128x32xf32, #tpu.memory_space<vmem>>, vector<32x32xf32>
    %cst_29 = arith.constant dense<0.000000e+00> : vector<8x32xf32>
    %211 = tpu.matmul %197, %210, %cst_29 {dimension_numbers = #tpu.dot_dimension_numbers<[1], [0], [0], [1], [0, 0, 1, 1], [], []>} : vector<8x32xf32>, vector<32x32xf32>, vector<8x32xf32> -> vector<8x32xf32>
    %c32_30 = arith.constant 32 : index
    %c0_31 = arith.constant 0 : index
    %212 = vector.load %arg4[%c32_30, %c0_31] : memref<128x32xf32, #tpu.memory_space<vmem>>, vector<32x32xf32>
    %cst_32 = arith.constant dense<0.000000e+00> : vector<8x32xf32>
    %213 = tpu.matmul %201, %212, %cst_32 {dimension_numbers = #tpu.dot_dimension_numbers<[1], [0], [0], [1], [0, 0, 1, 1], [], []>} : vector<8x32xf32>, vector<32x32xf32>, vector<8x32xf32> -> vector<8x32xf32>
    %214 = arith.addf %211, %213 : vector<8x32xf32>
    %c64_33 = arith.constant 64 : index
    %c0_34 = arith.constant 0 : index
    %215 = vector.load %arg4[%c64_33, %c0_34] : memref<128x32xf32, #tpu.memory_space<vmem>>, vector<32x32xf32>
    %cst_35 = arith.constant dense<0.000000e+00> : vector<8x32xf32>
    %216 = tpu.matmul %205, %215, %cst_35 {dimension_numbers = #tpu.dot_dimension_numbers<[1], [0], [0], [1], [0, 0, 1, 1], [], []>} : vector<8x32xf32>, vector<32x32xf32>, vector<8x32xf32> -> vector<8x32xf32>
    %217 = arith.addf %214, %216 : vector<8x32xf32>
    %c96_36 = arith.constant 96 : index
    %c0_37 = arith.constant 0 : index
    %218 = vector.load %arg4[%c96_36, %c0_37] : memref<128x32xf32, #tpu.memory_space<vmem>>, vector<32x32xf32>
    %cst_38 = arith.constant dense<0.000000e+00> : vector<8x32xf32>
    %219 = tpu.matmul %209, %218, %cst_38 {dimension_numbers = #tpu.dot_dimension_numbers<[1], [0], [0], [1], [0, 0, 1, 1], [], []>} : vector<8x32xf32>, vector<32x32xf32>, vector<8x32xf32> -> vector<8x32xf32>
    %220 = arith.addf %217, %219 : vector<8x32xf32>
    %c0_39 = arith.constant 0 : index
    %c0_40 = arith.constant 0 : index
    %221 = vector.load %arg5[%c0_39, %c0_40] : memref<8x32xf32, #tpu.memory_space<vmem>>, vector<8x32xf32>
    tpu.vector_store %arg5[%c0_39, %c0_40], %220 {strides = array<i32>} : memref<8x32xf32, #tpu.memory_space<vmem>>, vector<8x32xf32>,
    return
  }
  func.func @transform_0(%arg0: i32) -> (i32, i32) {
    %c0_i32 = arith.constant 0 : i32
    %c0_i32_0 = arith.constant 0 : i32
    return %arg0, %c0_i32 : i32, i32
  }
  func.func @transform_1(%arg0: i32) -> (i32, i32) {
    %c0_i32 = arith.constant 0 : i32
    %c0_i32_0 = arith.constant 0 : i32
    return %arg0, %c0_i32 : i32, i32
  }
  func.func @transform_2(%arg0: i32) -> (i32, i32) {
    %c0_i32 = arith.constant 0 : i32
    %c0_i32_0 = arith.constant 0 : i32
    %c0_i32_1 = arith.constant 0 : i32
    return %c0_i32, %c0_i32_0 : i32, i32
  }
  func.func @transform_3(%arg0: i32) -> (i32, i32) {
    %c0_i32 = arith.constant 0 : i32
    %c0_i32_0 = arith.constant 0 : i32
    %c0_i32_1 = arith.constant 0 : i32
    return %c0_i32, %c0_i32_0 : i32, i32
  }
  func.func @transform_4(%arg0: i32) -> (i32, i32) {
    %c0_i32 = arith.constant 0 : i32
    %c0_i32_0 = arith.constant 0 : i32
    return %arg0, %c0_i32 : i32, i32
  }
}

</mosaic_0001>

<llo_original>
// kernel: tile.18
$region0: #{tile.18}
  #allocation0 [shape = 's32[1]{0}', space=sflag, size = 0x4, scoped, tag = 'scoped memory for tile.18']
  %s0 = inlined_call_operand.vmem [shape: f32[4], index: 0, kind: input, shape index: {}]
  %s1 = inlined_call_operand.vmem [shape: f32[8,4], index: 1, kind: output, shape index: {}]
  // Predicated region
  $region2: #{tile.18} parent=0 // pred_check
    _
  $region3: #{tile.18} parent=0 // pred_check_branch
    %3 = sbr.rel (0) target = $region5
  $region4: #{tile.18} parent=0 // pred_region
    _
  $region5: #{tile.18} parent=0 // pred_fallthru
    _
  %v4 = vld [vmem:[%s0] ss:$0 sm:$0xff]
  %5 = vst [vmem:[%s1] sm:$0xff] %v4

// kernel: tile.28
$region0: #{tile.28}
  %s0 = inlined_call_operand.vmem [shape: f32[8,4], index: 0, kind: input, shape index: {}]
  %s1 = inlined_call_operand.vmem [shape: f32[1,32], index: 1, kind: output, shape index: {}]
  $region1: #{tile.28} parent=0
    #allocation0 [shape = 'u8[4096]{0}', space=vmem, size = 0x1000, scoped, tag = 'scoped mem for output reshape']
    %v2 = vld [vmem:[%s0] sm:$0x1]
    %vm3 = vcmask 31744
    %4 = vst.msk [vmem:[#allocation0] sm:$0x1] %vm3, %v2
    %s5 = scalar_lea.vmem %s0, 7
    %v6 = vld [vmem:[%s5] sm:$0x1]
    %7 = vrot.lane.b32.xlu0 %v6, 28
    %v8 = vpop.permute.xlu0 %7
    %vm9 = vcmask 261344
    %10 = vst.msk [vmem:[#allocation0] sm:$0x1] %vm9, %v8
    %s11 = scalar_lea.vmem %s0, 6
    %v12 = vld [vmem:[%s11] sm:$0x1]
    %13 = vrot.lane.b32.xlu0 %v12, 24
    %v14 = vpop.permute.xlu0 %13
    %vm15 = vcmask 228544
    %16 = vst.msk [vmem:[#allocation0] sm:$0x1] %vm15, %v14
    %s17 = scalar_lea.vmem %s0, 5
    %v18 = vld [vmem:[%s17] sm:$0x1]
    %19 = vrot.lane.b32.xlu0 %v18, 20
    %v20 = vpop.permute.xlu0 %19
    %vm21 = vcmask 195744
    %22 = vst.msk [vmem:[#allocation0] sm:$0x1] %vm21, %v20
    %s23 = scalar_lea.vmem %s0, 4
    %v24 = vld [vmem:[%s23] sm:$0x1]
    %25 = vrot.lane.b32.xlu0 %v24, 16
    %v26 = vpop.permute.xlu0 %25
    %vm27 = vcmask 162944
    %28 = vst.msk [vmem:[#allocation0] sm:$0x1] %vm27, %v26
    %s29 = scalar_lea.vmem %s0, 3
    %v30 = vld [vmem:[%s29] sm:$0x1]
    %31 = vrot.lane.b32.xlu0 %v30, 12
    %v32 = vpop.permute.xlu0 %31
    %vm33 = vcmask 130144
    %34 = vst.msk [vmem:[#allocation0] sm:$0x1] %vm33, %v32
    %s35 = scalar_lea.vmem %s0, 2
    %v36 = vld [vmem:[%s35] sm:$0x1]
    %37 = vrot.lane.b32.xlu0 %v36, 8
    %v38 = vpop.permute.xlu0 %37
    %vm39 = vcmask 97344
    %40 = vst.msk [vmem:[#allocation0] sm:$0x1] %vm39, %v38
    %s41 = scalar_lea.vmem %s0, 1
    %v42 = vld [vmem:[%s41] sm:$0x1]
    %43 = vrot.lane.b32.xlu0 %v42, 4
    %v44 = vpop.permute.xlu0 %43
    %vm45 = vcmask 64544
    %46 = vst.msk [vmem:[#allocation0] sm:$0x1] %vm45, %v44
    %s48 = ssub.s32 2, 1
    %v49 = vld [vmem:[#allocation0] sm:%s48]
    %s51 = ssub.s32 2, 1
    %52 = vst [vmem:[%s1] sm:%s51] %v49

// kernel: t2i_graph_convolution.1
$region0: #{t2i_graph_convolution.1}
  #allocation0 [shape = 'u32[]', space=smem, size = 0x4, offset = 0x4, fixed_abs, tag = 'smem constant byte address 0x4 - core index']
  #allocation1 [shape = 'u32[72,128]{1,0:T(1,128)}', space=vmem, size = 0x9000, scoped, tag = 'internal scratch']
  %s0 = inlined_call_operand.vmem [shape: f32[8,64], index: 0, kind: input, shape index: {}]
  %s1 = inlined_call_operand.vmem [shape: f32[8,256], index: 1, kind: input, shape index: {}]
  %s2 = inlined_call_operand.vmem [shape: f32[4,32], index: 2, kind: input, shape index: {}]
  %s3 = inlined_call_operand.vmem [shape: f32[128,32], index: 3, kind: input, shape index: {}]
  %s4 = inlined_call_operand.hbm [shape: f32[8,32], index: 4, kind: output, shape index: {}]
  %s5 = sld [smem:[#allocation0]]
  $region26: #{t2i_graph_convolution.1} parent=0
    _
  %s7 = ssub.s32 1, %s5
  %s8 = scalar_select 0, %s7, %s5
  $region1: #{t2i_graph_convolution.1} parent=0
    #allocation2 [shape = 'u8[4096]{0}', space=vmem, size = 0x1000, scoped, tag = 'output window, operand 0, single buffered']
    #allocation3 [shape = 's32[1]{0}', space=sflag, size = 0x4, scoped, tag = 'scoped memory for t2i_graph_convolution.1']
    %9 = vsyncpa [#allocation3], 0
    // Predicated region
    $region2: #{t2i_graph_convolution.1} parent=1 // pred_check
      _
    $region3: #{t2i_graph_convolution.1} parent=1 // pred_check_branch
      %11 = sbr.rel (0) target = $region5
    $region4: #{t2i_graph_convolution.1} parent=1 // pred_region
      _
    $region5: #{t2i_graph_convolution.1} parent=1 // pred_fallthru
      _
    // Predicated region
    $region6: #{t2i_graph_convolution.1} parent=1 // pred_check
      _
    $region7: #{t2i_graph_convolution.1} parent=1 // pred_check_branch
      %13 = sbr.rel (0) target = $region9
    $region8: #{t2i_graph_convolution.1} parent=1 // pred_region
      _
    $region9: #{t2i_graph_convolution.1} parent=1 // pred_fallthru
      _
    // Predicated region
    $region10: #{t2i_graph_convolution.1} parent=1 // pred_check
      _
    $region11: #{t2i_graph_convolution.1} parent=1 // pred_check_branch
      %15 = sbr.rel (0) target = $region13
    $region12: #{t2i_graph_convolution.1} parent=1 // pred_region
      _
    $region13: #{t2i_graph_convolution.1} parent=1 // pred_fallthru
      _
    // Predicated region
    $region14: #{t2i_graph_convolution.1} parent=1 // pred_check
      _
    $region15: #{t2i_graph_convolution.1} parent=1 // pred_check_branch
      %17 = sbr.rel (0) target = $region17
    $region16: #{t2i_graph_convolution.1} parent=1 // pred_region
      _
    $region17: #{t2i_graph_convolution.1} parent=1 // pred_fallthru
      _
    %v18 = vld [vmem:[%s2] sm:$0xf]
    %v19 = vld [vmem:[%s0] sm:$0xff]
    %v20 = vperm.slane %v18, 0
    %v21 = vsub.f32 %v19, %v20
    %v22 = vmul.f32 %v21, -0.5
    %v23 = vmul.f32 %v22, %v21
    %v24 = vmul.f32 %v18, %v18
    %v25 = vadd.f32 %v24, 1e-14
    %v26 = vperm.slane %v25, 1
    %v27 = vrcp.pop %v26
    %v28 = vmul.f32 %v26, %v27
    %v29 = vsub.f32 1.0, %v28
    %v30 = vmul.f32 %v27, %v29
    %v31 = vadd.f32 %v27, %v30
    %vm32 = vweird.f32 %v26
    %vm33 = vweird.f32 %v27
    %vm34 = vmor %vm32, %vm33
    %v35 = vsel %vm34, %v27, %v31
    %v36 = vand.u32 2147483647, %v26
    %vm37 = vcmp.eq.f32.partialorder %v36, 8.507059e+37
    %v38 = vand.u32 %v26, 2147483648
    %v39 = vor.u32 1.1754944e-38, %v38
    %v40 = vsel %vm37, %v39, %v35
    %v41 = vmul.f32 %v23, %v40
    %v42 = vmul.f32 %v41, 1.442695
    %v43 = vpow.pop %v42
    %v44 = vperm.slane %v18, 2
    %46 = vrot.lane.b32.xlu0 %v44, 32
    %v47 = vpop.permute.xlu0 %46
    %v49 = vsub.f32 %v19, %v47
    %v50 = vand.u32 2147483647, %v49
    %v51 = vsub.f32 6.2831855, %v50
    %v52 = vand.u32 2147483647, %v51
    %v53 = vmin.f32 %v50, %v52
    %v54 = vmul.f32 %v53, -0.5
    %v55 = vmul.f32 %v54, %v53
    %v56 = vperm.slane %v25, 3
    %58 = vrot.lane.b32.xlu0 %v56, 32
    %v59 = vpop.permute.xlu0 %58
    %v61 = vrcp.pop %v59
    %v62 = vmul.f32 %v59, %v61
    %v63 = vsub.f32 1.0, %v62
    %v64 = vmul.f32 %v61, %v63
    %v65 = vadd.f32 %v61, %v64
    %vm66 = vweird.f32 %v59
    %vm67 = vweird.f32 %v61
    %vm68 = vmor %vm66, %vm67
    %v69 = vsel %vm68, %v61, %v65
    %v70 = vand.u32 2147483647, %v59
    %vm71 = vcmp.eq.f32.partialorder %v70, 8.507059e+37
    %v72 = vand.u32 %v59, 2147483648
    %v73 = vor.u32 1.1754944e-38, %v72
    %v74 = vsel %vm71, %v73, %v69
    %v75 = vmul.f32 %v55, %v74
    %v76 = vmul.f32 %v75, 1.442695
    %v77 = vpow.pop %v76
    %79 = vrot.lane.b32.xlu0 %v77, 96
    %v80 = vpop.permute.xlu0 %79
    %v82 = vmul.f32 %v43, %v80
    %vm83 = vcmp.ne.f32.partialorder %v82, %v82
    %v84 = vsel %vm83, 0.0, %v82
    %vm85 = vcmask 31744
    %v86 = vsel %vm85, %v84, 0.0
    %87 = vadd.xlane.f32.xlu0 %v86
    %v88 = vpop.xlane.xlu0 %87
    %v89 = vrcp.pop %v88
    %v90 = vmul.f32 %v88, %v89
    %v91 = vsub.f32 1.0, %v90
    %v92 = vmul.f32 %v89, %v91
    %v93 = vadd.f32 %v89, %v92
    %vm94 = vweird.f32 %v88
    %vm95 = vweird.f32 %v89
    %vm96 = vmor %vm94, %vm95
    %v97 = vsel %vm96, %v89, %v93
    %v98 = vand.u32 2147483647, %v88
    %vm99 = vcmp.eq.f32.partialorder %v98, 8.507059e+37
    %v100 = vand.u32 %v88, 2147483648
    %v101 = vor.u32 1.1754944e-38, %v100
    %v102 = vsel %vm99, %v101, %v97
    %v103 = vmul.f32 %v84, %v102
    %v104 = vld [vmem:[%s1] sm:$0xff]
    %106 = vset.pattern.permute.xlu0 0
    %107 = vperm.xlu0 %106, %v103
    %v108 = vpop.permute.xlu0 %107
    %v110 = vmul.f32 %v108, %v104
    %111 = vset.pattern.permute.xlu0 1
    %112 = vperm.xlu0 %111, %v103
    %v113 = vpop.permute.xlu0 %112
    %v115 = vmul.f32 %v113, %v104
    %116 = vset.pattern.permute.xlu0 2
    %117 = vperm.xlu0 %116, %v103
    %v118 = vpop.permute.xlu0 %117
    %v120 = vmul.f32 %v118, %v104
    %121 = vset.pattern.permute.xlu0 3
    %122 = vperm.xlu0 %121, %v103
    %v123 = vpop.permute.xlu0 %122
    %v125 = vmul.f32 %v123, %v104
    %127 = vrot.lane.b32.xlu0 %v84, 124
    %v128 = vpop.permute.xlu0 %127
    %v130 = vsel %vm85, %v128, 0.0
    %131 = vadd.xlane.f32.xlu0 %v130
    %v132 = vpop.xlane.xlu0 %131
    %v133 = vrcp.pop %v132
    %v134 = vmul.f32 %v132, %v133
    %v135 = vsub.f32 1.0, %v134
    %v136 = vmul.f32 %v133, %v135
    %v137 = vadd.f32 %v133, %v136
    %vm138 = vweird.f32 %v132
    %vm139 = vweird.f32 %v133
    %vm140 = vmor %vm138, %vm139
    %v141 = vsel %vm140, %v133, %v137
    %v142 = vand.u32 2147483647, %v132
    %vm143 = vcmp.eq.f32.partialorder %v142, 8.507059e+37
    %v144 = vand.u32 %v132, 2147483648
    %v145 = vor.u32 1.1754944e-38, %v144
    %v146 = vsel %vm143, %v145, %v141
    %v147 = vmul.f32 %v84, %v146
    %149 = vset.pattern.permute.xlu0 4
    %150 = vperm.xlu0 %149, %v147
    %v151 = vpop.permute.xlu0 %150
    %v153 = vmul.f32 %v151, %v104
    %155 = vrot.lane.b32.xlu0 %v153, 96
    %v156 = vpop.permute.xlu0 %155
    %v158 = vadd.f32 %v110, %v156
    %159 = vset.pattern.permute.xlu0 5
    %160 = vperm.xlu0 %159, %v147
    %v161 = vpop.permute.xlu0 %160
    %v163 = vmul.f32 %v161, %v104
    %165 = vrot.lane.b32.xlu0 %v163, 96
    %v166 = vpop.permute.xlu0 %165
    %v168 = vadd.f32 %v115, %v166
    %169 = vset.pattern.permute.xlu0 6
    %170 = vperm.xlu0 %169, %v147
    %v171 = vpop.permute.xlu0 %170
    %v173 = vmul.f32 %v171, %v104
    %175 = vrot.lane.b32.xlu0 %v173, 96
    %v176 = vpop.permute.xlu0 %175
    %v178 = vadd.f32 %v120, %v176
    %179 = vset.pattern.permute.xlu0 7
    %180 = vperm.xlu0 %179, %v147
    %v181 = vpop.permute.xlu0 %180
    %v183 = vmul.f32 %v181, %v104
    %185 = vrot.lane.b32.xlu0 %v183, 96
    %v186 = vpop.permute.xlu0 %185
    %v188 = vadd.f32 %v125, %v186
    %189 = vrot.lane.b32.xlu0 %v84, 120
    %v190 = vpop.permute.xlu0 %189
    %v192 = vsel %vm85, %v190, 0.0
    %193 = vadd.xlane.f32.xlu0 %v192
    %v194 = vpop.xlane.xlu0 %193
    %v195 = vrcp.pop %v194
    %v196 = vmul.f32 %v194, %v195
    %v197 = vsub.f32 1.0, %v196
    %v198 = vmul.f32 %v195, %v197
    %v199 = vadd.f32 %v195, %v198
    %vm200 = vweird.f32 %v194
    %vm201 = vweird.f32 %v195
    %vm202 = vmor %vm200, %vm201
    %v203 = vsel %vm202, %v195, %v199
    %v204 = vand.u32 2147483647, %v194
    %vm205 = vcmp.eq.f32.partialorder %v204, 8.507059e+37
    %v206 = vand.u32 %v194, 2147483648
    %v207 = vor.u32 1.1754944e-38, %v206
    %v208 = vsel %vm205, %v207, %v203
    %v209 = vmul.f32 %v84, %v208
    %211 = vset.pattern.permute.xlu0 8
    %212 = vperm.xlu0 %211, %v209
    %v213 = vpop.permute.xlu0 %212
    %v215 = vmul.f32 %v213, %v104
    %217 = vrot.lane.b32.xlu0 %v215, 64
    %v218 = vpop.permute.xlu0 %217
    %v220 = vadd.f32 %v158, %v218
    %221 = vset.pattern.permute.xlu0 9
    %222 = vperm.xlu0 %221, %v209
    %v223 = vpop.permute.xlu0 %222
    %v225 = vmul.f32 %v223, %v104
    %227 = vrot.lane.b32.xlu0 %v225, 64
    %v228 = vpop.permute.xlu0 %227
    %v230 = vadd.f32 %v168, %v228
    %231 = vset.pattern.permute.xlu0 10
    %232 = vperm.xlu0 %231, %v209
    %v233 = vpop.permute.xlu0 %232
    %v235 = vmul.f32 %v233, %v104
    %237 = vrot.lane.b32.xlu0 %v235, 64
    %v238 = vpop.permute.xlu0 %237
    %v240 = vadd.f32 %v178, %v238
    %241 = vset.pattern.permute.xlu0 11
    %242 = vperm.xlu0 %241, %v209
    %v243 = vpop.permute.xlu0 %242
    %v245 = vmul.f32 %v243, %v104
    %247 = vrot.lane.b32.xlu0 %v245, 64
    %v248 = vpop.permute.xlu0 %247
    %v250 = vadd.f32 %v188, %v248
    %251 = vrot.lane.b32.xlu0 %v84, 116
    %v252 = vpop.permute.xlu0 %251
    %v254 = vsel %vm85, %v252, 0.0
    %255 = vadd.xlane.f32.xlu0 %v254
    %v256 = vpop.xlane.xlu0 %255
    %v257 = vrcp.pop %v256
    %v258 = vmul.f32 %v256, %v257
    %v259 = vsub.f32 1.0, %v258
    %v260 = vmul.f32 %v257, %v259
    %v261 = vadd.f32 %v257, %v260
    %vm262 = vweird.f32 %v256
    %vm263 = vweird.f32 %v257
    %vm264 = vmor %vm262, %vm263
    %v265 = vsel %vm264, %v257, %v261
    %v266 = vand.u32 2147483647, %v256
    %vm267 = vcmp.eq.f32.partialorder %v266, 8.507059e+37
    %v268 = vand.u32 %v256, 2147483648
    %v269 = vor.u32 1.1754944e-38, %v268
    %v270 = vsel %vm267, %v269, %v265
    %v271 = vmul.f32 %v84, %v270
    %273 = vset.pattern.permute.xlu0 12
    %274 = vperm.xlu0 %273, %v271
    %v275 = vpop.permute.xlu0 %274
    %v277 = vmul.f32 %v275, %v104
    %279 = vrot.lane.b32.xlu0 %v277, 32
    %v280 = vpop.permute.xlu0 %279
    %v282 = vadd.f32 %v220, %v280
    %283 = vset.pattern.permute.xlu0 13
    %284 = vperm.xlu0 %283, %v271
    %v285 = vpop.permute.xlu0 %284
    %v287 = vmul.f32 %v285, %v104
    %289 = vrot.lane.b32.xlu0 %v287, 32
    %v290 = vpop.permute.xlu0 %289
    %v292 = vadd.f32 %v230, %v290
    %293 = vset.pattern.permute.xlu0 14
    %294 = vperm.xlu0 %293, %v271
    %v295 = vpop.permute.xlu0 %294
    %v297 = vmul.f32 %v295, %v104
    %299 = vrot.lane.b32.xlu0 %v297, 32
    %v300 = vpop.permute.xlu0 %299
    %v302 = vadd.f32 %v240, %v300
    %303 = vset.pattern.permute.xlu0 15
    %304 = vperm.xlu0 %303, %v271
    %v305 = vpop.permute.xlu0 %304
    %v307 = vmul.f32 %v305, %v104
    %309 = vrot.lane.b32.xlu0 %v307, 32
    %v310 = vpop.permute.xlu0 %309
    %v312 = vadd.f32 %v250, %v310
    %313 = vrot.lane.b32.xlu0 %v84, 112
    %v314 = vpop.permute.xlu0 %313
    %v316 = vsel %vm85, %v314, 0.0
    %317 = vadd.xlane.f32.xlu0 %v316
    %v318 = vpop.xlane.xlu0 %317
    %v319 = vrcp.pop %v318
    %v320 = vmul.f32 %v318, %v319
    %v321 = vsub.f32 1.0, %v320
    %v322 = vmul.f32 %v319, %v321
    %v323 = vadd.f32 %v319, %v322
    %vm324 = vweird.f32 %v318
    %vm325 = vweird.f32 %v319
    %vm326 = vmor %vm324, %vm325
    %v327 = vsel %vm326, %v319, %v323
    %v328 = vand.u32 2147483647, %v318
    %vm329 = vcmp.eq.f32.partialorder %v328, 8.507059e+37
    %v330 = vand.u32 %v318, 2147483648
    %v331 = vor.u32 1.1754944e-38, %v330
    %v332 = vsel %vm329, %v331, %v327
    %v333 = vmul.f32 %v84, %v332
    %v334 = vld [vmem:[%s1 + $0x8] sm:$0xff]
    %336 = vset.pattern.permute.xlu0 16
    %337 = vperm.xlu0 %336, %v333
    %v338 = vpop.permute.xlu0 %337
    %v340 = vmul.f32 %v338, %v334
    %v341 = vadd.f32 %v282, %v340
    %342 = vset.pattern.permute.xlu0 17
    %343 = vperm.xlu0 %342, %v333
    %v344 = vpop.permute.xlu0 %343
    %v346 = vmul.f32 %v344, %v334
    %v347 = vadd.f32 %v292, %v346
    %348 = vset.pattern.permute.xlu0 18
    %349 = vperm.xlu0 %348, %v333
    %v350 = vpop.permute.xlu0 %349
    %v352 = vmul.f32 %v350, %v334
    %v353 = vadd.f32 %v302, %v352
    %354 = vset.pattern.permute.xlu0 19
    %355 = vperm.xlu0 %354, %v333
    %v356 = vpop.permute.xlu0 %355
    %v358 = vmul.f32 %v356, %v334
    %v359 = vadd.f32 %v312, %v358
    %360 = vrot.lane.b32.xlu0 %v84, 108
    %v361 = vpop.permute.xlu0 %360
    %v363 = vsel %vm85, %v361, 0.0
    %364 = vadd.xlane.f32.xlu0 %v363
    %v365 = vpop.xlane.xlu0 %364
    %v366 = vrcp.pop %v365
    %v367 = vmul.f32 %v365, %v366
    %v368 = vsub.f32 1.0, %v367
    %v369 = vmul.f32 %v366, %v368
    %v370 = vadd.f32 %v366, %v369
    %vm371 = vweird.f32 %v365
    %vm372 = vweird.f32 %v366
    %vm373 = vmor %vm371, %vm372
    %v374 = vsel %vm373, %v366, %v370
    %v375 = vand.u32 2147483647, %v365
    %vm376 = vcmp.eq.f32.partialorder %v375, 8.507059e+37
    %v377 = vand.u32 %v365, 2147483648
    %v378 = vor.u32 1.1754944e-38, %v377
    %v379 = vsel %vm376, %v378, %v374
    %v380 = vmul.f32 %v84, %v379
    %382 = vset.pattern.permute.xlu0 20
    %383 = vperm.xlu0 %382, %v380
    %v384 = vpop.permute.xlu0 %383
    %v386 = vmul.f32 %v384, %v334
    %388 = vrot.lane.b32.xlu0 %v386, 96
    %v389 = vpop.permute.xlu0 %388
    %v391 = vadd.f32 %v341, %v389
    %392 = vset.pattern.permute.xlu0 21
    %393 = vperm.xlu0 %392, %v380
    %v394 = vpop.permute.xlu0 %393
    %v396 = vmul.f32 %v394, %v334
    %398 = vrot.lane.b32.xlu0 %v396, 96
    %v399 = vpop.permute.xlu0 %398
    %v401 = vadd.f32 %v347, %v399
    %402 = vset.pattern.permute.xlu0 22
    %403 = vperm.xlu0 %402, %v380
    %v404 = vpop.permute.xlu0 %403
    %v406 = vmul.f32 %v404, %v334
    %408 = vrot.lane.b32.xlu0 %v406, 96
    %v409 = vpop.permute.xlu0 %408
    %v411 = vadd.f32 %v353, %v409
    %412 = vset.pattern.permute.xlu0 23
    %413 = vperm.xlu0 %412, %v380
    %v414 = vpop.permute.xlu0 %413
    %v416 = vmul.f32 %v414, %v334
    %418 = vrot.lane.b32.xlu0 %v416, 96
    %v419 = vpop.permute.xlu0 %418
    %v421 = vadd.f32 %v359, %v419
    %422 = vrot.lane.b32.xlu0 %v84, 104
    %v423 = vpop.permute.xlu0 %422
    %v425 = vsel %vm85, %v423, 0.0
    %426 = vadd.xlane.f32.xlu0 %v425
    %v427 = vpop.xlane.xlu0 %426
    %v428 = vrcp.pop %v427
    %v429 = vmul.f32 %v427, %v428
    %v430 = vsub.f32 1.0, %v429
    %v431 = vmul.f32 %v428, %v430
    %v432 = vadd.f32 %v428, %v431
    %vm433 = vweird.f32 %v427
    %vm434 = vweird.f32 %v428
    %vm435 = vmor %vm433, %vm434
    %v436 = vsel %vm435, %v428, %v432
    %v437 = vand.u32 2147483647, %v427
    %vm438 = vcmp.eq.f32.partialorder %v437, 8.507059e+37
    %v439 = vand.u32 %v427, 2147483648
    %v440 = vor.u32 1.1754944e-38, %v439
    %v441 = vsel %vm438, %v440, %v436
    %v442 = vmul.f32 %v84, %v441
    %444 = vset.pattern.permute.xlu0 24
    %445 = vperm.xlu0 %444, %v442
    %v446 = vpop.permute.xlu0 %445
    %v448 = vmul.f32 %v446, %v334
    %450 = vrot.lane.b32.xlu0 %v448, 64
    %v451 = vpop.permute.xlu0 %450
    %v453 = vadd.f32 %v391, %v451
    %454 = vset.pattern.permute.xlu0 25
    %455 = vperm.xlu0 %454, %v442
    %v456 = vpop.permute.xlu0 %455
    %v458 = vmul.f32 %v456, %v334
    %460 = vrot.lane.b32.xlu0 %v458, 64
    %v461 = vpop.permute.xlu0 %460
    %v463 = vadd.f32 %v401, %v461
    %464 = vset.pattern.permute.xlu0 26
    %465 = vperm.xlu0 %464, %v442
    %v466 = vpop.permute.xlu0 %465
    %v468 = vmul.f32 %v466, %v334
    %470 = vrot.lane.b32.xlu0 %v468, 64
    %v471 = vpop.permute.xlu0 %470
    %v473 = vadd.f32 %v411, %v471
    %474 = vset.pattern.permute.xlu0 27
    %475 = vperm.xlu0 %474, %v442
    %v476 = vpop.permute.xlu0 %475
    %v478 = vmul.f32 %v476, %v334
    %480 = vrot.lane.b32.xlu0 %v478, 64
    %v481 = vpop.permute.xlu0 %480
    %v483 = vadd.f32 %v421, %v481
    %484 = vrot.lane.b32.xlu0 %v84, 100
    %v485 = vpop.permute.xlu0 %484
    %v487 = vsel %vm85, %v485, 0.0
    %488 = vadd.xlane.f32.xlu0 %v487
    %v489 = vpop.xlane.xlu0 %488
    %v490 = vrcp.pop %v489
    %v491 = vmul.f32 %v489, %v490
    %v492 = vsub.f32 1.0, %v491
    %v493 = vmul.f32 %v490, %v492
    %v494 = vadd.f32 %v490, %v493
    %vm495 = vweird.f32 %v489
    %vm496 = vweird.f32 %v490
    %vm497 = vmor %vm495, %vm496
    %v498 = vsel %vm497, %v490, %v494
    %v499 = vand.u32 2147483647, %v489
    %vm500 = vcmp.eq.f32.partialorder %v499, 8.507059e+37
    %v501 = vand.u32 %v489, 2147483648
    %v502 = vor.u32 1.1754944e-38, %v501
    %v503 = vsel %vm500, %v502, %v498
    %v504 = vmul.f32 %v84, %v503
    %506 = vset.pattern.permute.xlu0 28
    %507 = vperm.xlu0 %506, %v504
    %v508 = vpop.permute.xlu0 %507
    %v510 = vmul.f32 %v508, %v334
    %512 = vrot.lane.b32.xlu0 %v510, 32
    %v513 = vpop.permute.xlu0 %512
    %v515 = vadd.f32 %v453, %v513
    %516 = vset.pattern.permute.xlu0 29
    %517 = vperm.xlu0 %516, %v504
    %v518 = vpop.permute.xlu0 %517
    %v520 = vmul.f32 %v518, %v334
    %522 = vrot.lane.b32.xlu0 %v520, 32
    %v523 = vpop.permute.xlu0 %522
    %v525 = vadd.f32 %v463, %v523
    %526 = vset.pattern.permute.xlu0 30
    %527 = vperm.xlu0 %526, %v504
    %v528 = vpop.permute.xlu0 %527
    %v530 = vmul.f32 %v528, %v334
    %532 = vrot.lane.b32.xlu0 %v530, 32
    %v533 = vpop.permute.xlu0 %532
    %v535 = vadd.f32 %v473, %v533
    %536 = vset.pattern.permute.xlu0 31
    %537 = vperm.xlu0 %536, %v504
    %v538 = vpop.permute.xlu0 %537
    %v540 = vmul.f32 %v538, %v334
    %542 = vrot.lane.b32.xlu0 %v540, 32
    %v543 = vpop.permute.xlu0 %542
    %v545 = vadd.f32 %v483, %v543
    %v546 = vld [vmem:[%s3] sm:$0xff]
    %v547 = vld [vmem:[%s3 + $0x8] sm:$0xff]
    %v548 = vld [vmem:[%s3 + $0x10] sm:$0xff]
    %v549 = vld [vmem:[%s3 + $0x18] sm:$0xff]
    %v550 = vld [vmem:[%s3 + $0x20] sm:$0xff]
    %v551 = vld [vmem:[%s3 + $0x28] sm:$0xff]
    %v552 = vld [vmem:[%s3 + $0x30] sm:$0xff]
    %v553 = vld [vmem:[%s3 + $0x38] sm:$0xff]
    %vm554 = vcmask 261120
    %v556 = vsel %vm554, %v525, 0
    %558 = vmatpush.msra.mxu0 0.0
    %559 = vmatpush.msra.mxu0 0.0
    %560 = vmatpush.msra.mxu0 0.0
    %561 = vmatpush.msra.mxu0 0.0
    %562 = vmatpush.msra.mxu0 0.0
    %563 = vmatpush.msra.mxu0 0.0
    %564 = vmatpush.msra.mxu0 0.0
    %565 = vmatpush.msra.mxu0 0.0
    %566 = vmatpush.msra.mxu0 0.0
    %567 = vmatpush.msra.mxu0 0.0
    %568 = vmatpush.msra.mxu0 0.0
    %569 = vmatpush.msra.mxu0 0.0
    %570 = vmatpush.msra.mxu0 %v553
    %571 = vmatpush.msra.mxu0 %v552
    %572 = vmatpush.msra.mxu0 %v551
    %573 = vmatpush.msra.mxu0 %v550
    %574 = vmatmul.f32.gmra.mxu0 %v556
    %v575 = vpop.f32.mrf.mxu0
    %v576 = vadd.f32 0.0, %v575
    %577 = vdwg.mxu0
    %v579 = vsel %vm554, %v515, 0
    %581 = vmatpush.msra.mxu0 0.0
    %582 = vmatpush.msra.mxu0 0.0
    %583 = vmatpush.msra.mxu0 0.0
    %584 = vmatpush.msra.mxu0 0.0
    %585 = vmatpush.msra.mxu0 0.0
    %586 = vmatpush.msra.mxu0 0.0
    %587 = vmatpush.msra.mxu0 0.0
    %588 = vmatpush.msra.mxu0 0.0
    %589 = vmatpush.msra.mxu0 0.0
    %590 = vmatpush.msra.mxu0 0.0
    %591 = vmatpush.msra.mxu0 0.0
    %592 = vmatpush.msra.mxu0 0.0
    %593 = vmatpush.msra.mxu0 %v549
    %594 = vmatpush.msra.mxu0 %v548
    %595 = vmatpush.msra.mxu0 %v547
    %596 = vmatpush.msra.mxu0 %v546
    %597 = vmatmul.f32.gmra.mxu0 %v579
    %v598 = vpop.f32.mrf.mxu0
    %v599 = vadd.f32 %v576, %v598
    %600 = vdwg.mxu0
    %v601 = vld [vmem:[%s3 + $0x40] sm:$0xff]
    %v602 = vld [vmem:[%s3 + $0x48] sm:$0xff]
    %v603 = vld [vmem:[%s3 + $0x50] sm:$0xff]
    %v604 = vld [vmem:[%s3 + $0x58] sm:$0xff]
    %v606 = vsel %vm554, %v535, 0
    %608 = vmatpush.msra.mxu0 0.0
    %609 = vmatpush.msra.mxu0 0.0
    %610 = vmatpush.msra.mxu0 0.0
    %611 = vmatpush.msra.mxu0 0.0
    %612 = vmatpush.msra.mxu0 0.0
    %613 = vmatpush.msra.mxu0 0.0
    %614 = vmatpush.msra.mxu0 0.0
    %615 = vmatpush.msra.mxu0 0.0
    %616 = vmatpush.msra.mxu0 0.0
    %617 = vmatpush.msra.mxu0 0.0
    %618 = vmatpush.msra.mxu0 0.0
    %619 = vmatpush.msra.mxu0 0.0
    %620 = vmatpush.msra.mxu0 %v604
    %621 = vmatpush.msra.mxu0 %v603
    %622 = vmatpush.msra.mxu0 %v602
    %623 = vmatpush.msra.mxu0 %v601
    %624 = vmatmul.f32.gmra.mxu0 %v606
    %v625 = vpop.f32.mrf.mxu0
    %v626 = vadd.f32 0.0, %v625
    %627 = vdwg.mxu0
    %v628 = vadd.f32 %v599, %v626
    %v629 = vld [vmem:[%s3 + $0x60] sm:$0xff]
    %v630 = vld [vmem:[%s3 + $0x68] sm:$0xff]
    %v631 = vld [vmem:[%s3 + $0x70] sm:$0xff]
    %v632 = vld [vmem:[%s3 + $0x78] sm:$0xff]
    %v634 = vsel %vm554, %v545, 0
    %636 = vmatpush.msra.mxu0 0.0
    %637 = vmatpush.msra.mxu0 0.0
    %638 = vmatpush.msra.mxu0 0.0
    %639 = vmatpush.msra.mxu0 0.0
    %640 = vmatpush.msra.mxu0 0.0
    %641 = vmatpush.msra.mxu0 0.0
    %642 = vmatpush.msra.mxu0 0.0
    %643 = vmatpush.msra.mxu0 0.0
    %644 = vmatpush.msra.mxu0 0.0
    %645 = vmatpush.msra.mxu0 0.0
    %646 = vmatpush.msra.mxu0 0.0
    %647 = vmatpush.msra.mxu0 0.0
    %648 = vmatpush.msra.mxu0 %v632
    %649 = vmatpush.msra.mxu0 %v631
    %650 = vmatpush.msra.mxu0 %v630
    %651 = vmatpush.msra.mxu0 %v629
    %652 = vmatmul.f32.gmra.mxu0 %v634
    %v653 = vpop.f32.mrf.mxu0
    %v654 = vadd.f32 0.0, %v653
    %655 = vdwg.mxu0
    %v656 = vadd.f32 %v628, %v654
    %657 = vst.msk [vmem:[#allocation2] sm:$0xff] %vm554, %v656
    // Predicated region
    $region18: #{t2i_graph_convolution.1} parent=1 // pred_check
      _
    $region19: #{t2i_graph_convolution.1} parent=1 // pred_check_branch
      %659 = sbr.rel (0) target = $region21
    $region20: #{t2i_graph_convolution.1} parent=1 // pred_region
      %661 = vsyncadd [#allocation3], 0
      %s663 = sshll.u32 [#allocation2], 4
      %s664 = int_to_ptr.vmem [resolvable:$true] %s663
      %s665 = sshll.u32 %s4, 4
      %s666 = int_to_ptr.hbm [resolvable:$true] %s665
      %668 = dma.vmem_to_hbm [thread:$0]  %s664, 128, %s666, [#allocation3]
    $region21: #{t2i_graph_convolution.1} parent=1 // pred_fallthru
      _
    // Predicated region
    $region22: #{t2i_graph_convolution.1} parent=1 // pred_check
      _
    $region23: #{t2i_graph_convolution.1} parent=1 // pred_check_branch
      %670 = sbr.rel (0) target = $region25
    $region24: #{t2i_graph_convolution.1} parent=1 // pred_region
      %672 = dma.done [#allocation3], 128
    $region25: #{t2i_graph_convolution.1} parent=1 // pred_fallthru
      _
    %673 = vsyncpa [#allocation3], 1

</llo_original>
